<compile_context>
chip_gen: v5e
topology: v5e:2x2
jax: 0.10.0
libtpu: 0.0.40
codegen_flags: <defaults>
</compile_context>

<pallas_src>
import functools

import jax
import jax.numpy as jnp
from jax.experimental import pallas as pl
from jax.experimental.pallas import tpu as pltpu

_LANE = 128      # lane width of a vreg
_SUBLANE = 8     # sublane count of a vreg


def _round_up(n, m):
    return ((n + m - 1) // m) * m


def _softplus(x):
    # numerically stable softplus: max(x,0) + log1p(exp(-|x|))
    return jnp.maximum(x, 0.0) + jnp.log1p(jnp.exp(-jnp.abs(x)))


def expert_kernel(x_ref, w1_ref, b1_ref, wh_ref, bh_ref, h_ref, head_ref, *,
                  var_col, head_p):
    """One row-tile of the Expert forward.

    x_ref    : (TB, in_p)      bf16 input rows (zero-padded features)
    w1_ref   : (in_p, hid_p)   bf16 encoder weight (zero-padded)
    b1_ref   : (1, hid_p)      f32 encoder bias
    wh_ref   : (hid_p, head_p) bf16 fused [mean | var] head weight
    bh_ref   : (1, head_p)     f32 fused [mean | var] head bias
    h_ref    : (TB, hid_p)     ReLU(encoder) output (lane-dense)
    head_ref : (TB, head_p)    [mu (C lanes) | logv (1 lane) | zero padding]
    """
    # encoder: Linear -> ReLU (-> Dropout identity at eval). bf16 MXU, f32 acc.
    h = jnp.dot(x_ref[...], w1_ref[...], preferred_element_type=jnp.float32)
    h = jnp.maximum(h + b1_ref[...], 0.0)
    h_ref[...] = h.astype(h_ref.dtype)

    # fused heads: one bf16 MXU pass produces [mu | var_pre | pad]
    head = jnp.dot(h.astype(wh_ref.dtype), wh_ref[...],
                   preferred_element_type=jnp.float32) + bh_ref[...]

    # Softplus -> clamp(1e-6) -> log only on the last 128-lane chunk (which
    # contains the single variance column); mean lanes pass through untouched.
    cs = head_p - _LANE                               # static chunk start
    chunk = head[:, cs:]
    logv_chunk = jnp.log(jnp.maximum(_softplus(chunk), 1e-6))
    lane = jax.lax.broadcasted_iota(jnp.int32, chunk.shape, 1)
    blended = jnp.where(lane == (var_col - cs), logv_chunk, chunk)

    if cs > 0:  # static: mean-only chunks stored straight through
        head_ref[:, :cs] = head[:, :cs].astype(head_ref.dtype)
    head_ref[:, cs:] = blended.astype(head_ref.dtype)


def pad_weights(w1, b1, wm, bm, wv, bv, *, compute_dtype=jnp.bfloat16):
    """Pad/fuse the (call-invariant) weights once, off the per-call hot path.

    Weights are stored pre-transposed for `x @ W`:
    w1:(in,hid) b1:(1,hid) wm:(hid,C) bm:(1,C) wv:(hid,1) bv:(1,1).
    """
    in_dim, hid = w1.shape
    C = wm.shape[1]
    in_p = _round_up(in_dim, _LANE)
    hid_p = _round_up(hid, _LANE)
    head_p = _round_up(C + 1, _LANE)
    f32 = jnp.float32

    w1p = (jnp.zeros((in_p, hid_p), f32)
           .at[:in_dim, :hid].set(w1.astype(f32))).astype(compute_dtype)
    b1p = jnp.zeros((1, hid_p), f32).at[:, :hid].set(b1.reshape(1, hid).astype(f32))

    # Fused head weight/bias: columns [0:C] = mean head, column C = var head.
    wh = (jnp.zeros((hid_p, head_p), f32)
          .at[:hid, :C].set(wm.astype(f32))
          .at[:hid, C:C + 1].set(wv.astype(f32))).astype(compute_dtype)
    bh = (jnp.zeros((1, head_p), f32)
          .at[:, :C].set(bm.reshape(1, C).astype(f32))
          .at[:, C:C + 1].set(bv.reshape(1, 1).astype(f32)))

    dims = dict(in_dim=in_dim, hid=hid, C=C, in_p=in_p, hid_p=hid_p, head_p=head_p)
    return (w1p, b1p, wh, bh), dims


def expert_apply(x, padded, dims, *, row_cap=256, out_dtype=jnp.float32):
    """Run the Expert forward on a batch of rows using the pre-padded weights."""
    w1p, b1p, wh, bh = padded
    B = x.shape[0]
    in_dim, hid, C = dims["in_dim"], dims["hid"], dims["C"]
    in_p, hid_p, head_p = dims["in_p"], dims["hid_p"], dims["head_p"]
    cdtype = w1p.dtype

    # Row tile: aim for >= 2 grid steps when the batch allows (so the
    # "parallel" axis shards across both v7x TensorCores and the x DMA is
    # pipelined), capped at `row_cap` rows; multiple of the 8-sublane unit.
    half = _round_up(pl.cdiv(B, 2), _SUBLANE)
    TB = max(_SUBLANE, min(_round_up(row_cap, _SUBLANE), half))
    grid = (pl.cdiv(B, TB),)   # partial last tile masked by Pallas; no batch pad

    # Feature (K) axis padding must stay explicit zeros.
    if in_dim == in_p and x.dtype == cdtype:
        xp = x
    else:
        xp = jnp.zeros((B, in_p), cdtype).at[:, :in_dim].set(x.astype(cdtype))

    row_spec = lambda w: pl.BlockSpec((TB, w), lambda i: (i, 0))
    # Grid-invariant weights/biases: VMEM-resident, single-buffered.
    const_spec = lambda s: pl.BlockSpec(s, lambda i: (0, 0),
                                        pipeline_mode=pl.Buffered(1))

    try:
        vmem_cap = pltpu.get_tpu_info().vmem_capacity_bytes
    except Exception:
        vmem_cap = 64 * 1024 * 1024
    vmem_limit = min(int(vmem_cap * 0.85), 112 * 1024 * 1024)

    kernel = functools.partial(expert_kernel, var_col=C, head_p=head_p)

    h_pad, head_pad = pl.pallas_call(
        kernel,
        out_shape=(
            jax.ShapeDtypeStruct((B, hid_p), out_dtype),
            jax.ShapeDtypeStruct((B, head_p), out_dtype),
        ),
        grid=grid,
        in_specs=[
            row_spec(in_p),                  # x rows
            const_spec((in_p, hid_p)),       # w1
            const_spec((1, hid_p)),          # b1
            const_spec((hid_p, head_p)),     # fused head weight
            const_spec((1, head_p)),         # fused head bias
        ],
        out_specs=(
            row_spec(hid_p),                 # h slab
            row_spec(head_p),                # [mu | logv | pad] slab
        ),
        compiler_params=pltpu.CompilerParams(
            dimension_semantics=("parallel",),
            vmem_limit_bytes=vmem_limit,
        ),
    )(xp, w1p, b1p, wh, bh)

    h = h_pad if hid == hid_p else h_pad[:, :hid]
    mu = head_pad[:, :C]
    logv = head_pad[:, C:C + 1]
    return h, mu, logv


def expert_forward(x, w1, b1, wm, bm, wv, bv, **kw):
    """Convenience one-shot wrapper (pads weights then applies)."""
    padded, dims = pad_weights(w1, b1, wm, bm, wv, bv)
    return expert_apply(x, padded, dims, **kw)


def make_params(key, in_dim, hid_dim, num_classes):
    ks = jax.random.split(key, 6)
    # deterministic init; stored pre-transposed for x @ W
    w1 = jax.random.uniform(ks[0], (in_dim, hid_dim), jnp.float32, -0.1, 0.1)
    b1 = jax.random.uniform(ks[1], (1, hid_dim), jnp.float32, -0.1, 0.1)
    wm = jax.random.uniform(ks[2], (hid_dim, num_classes), jnp.float32, -0.1, 0.1)
    bm = jax.random.uniform(ks[3], (1, num_classes), jnp.float32, -0.1, 0.1)
    wv = jax.random.uniform(ks[4], (hid_dim, 1), jnp.float32, -0.1, 0.1)
    bv = jax.random.uniform(ks[5], (1, 1), jnp.float32, -0.1, 0.1)
    return w1, b1, wm, bm, wv, bv


def expert_ref(x, w1, b1, wm, bm, wv, bv):
    # pure-JAX f32 reference for correctness check
    h = jnp.maximum(x @ w1 + b1, 0.0)
    mu = h @ wm + bm
    v = jnp.maximum(jax.nn.softplus(h @ wv + bv), 1e-6)
    return h, mu, jnp.log(v)


if __name__ == "__main__":
    B, in_dim, hid_dim, num_classes = 8, 32, 32, 4

    key = jax.random.PRNGKey(0)
    k_x, k_p = jax.random.split(key)
    x = jax.random.normal(k_x, (B, in_dim), jnp.float32)
    params = make_params(k_p, in_dim, hid_dim, num_classes)

    padded, dims = pad_weights(*params)          # once, off the hot path
    h, mu, logv = expert_apply(x, padded, dims)
    jax.block_until_ready((h, mu, logv))

    h_r, mu_r, logv_r = expert_ref(x, *params)
    assert h.shape == (B, hid_dim) and mu.shape == (B, num_classes) and logv.shape == (B, 1)
    # bf16 matmuls (f32 accumulation) -> relaxed tolerance vs the f32 reference
    assert jnp.allclose(h, h_r, atol=2e-2, rtol=2e-2)
    assert jnp.allclose(mu, mu_r, atol=2e-2, rtol=2e-2)
    assert jnp.allclose(logv, logv_r, atol=2e-2, rtol=2e-2)

    print("KERNEL_OK")
</pallas_src>

<mosaic_0001>
module attributes {stable_mosaic.version = 11 : i64} {
  func.func @expert_kernel(%arg0: i32, %arg1: memref<8x128xbf16, #tpu.memory_space<vmem>>, %arg2: memref<128x128xbf16, #tpu.memory_space<vmem>>, %arg3: memref<1x128xf32, #tpu.memory_space<vmem>>, %arg4: memref<128x128xbf16, #tpu.memory_space<vmem>>, %arg5: memref<1x128xf32, #tpu.memory_space<vmem>>, %arg6: memref<8x128xf32, #tpu.memory_space<vmem>>, %arg7: memref<8x128xf32, #tpu.memory_space<vmem>>) attributes {dimension_semantics = [#tpu.dimension_semantics<parallel>], iteration_bounds = array<i64: 1>, scalar_prefetch = 0 : i64, scratch_operands = 0 : i64, tpu.core_type = #tpu.core_type<tc>, window_params = [{transform_indices = @transform_0, window_bounds = array<i64: 8, 128>}, {pipeline_mode = #tpu.pipeline_mode<synchronous>, transform_indices = @transform_1, window_bounds = array<i64: 128, 128>}, {pipeline_mode = #tpu.pipeline_mode<synchronous>, transform_indices = @transform_2, window_bounds = array<i64: 1, 128>}, {pipeline_mode = #tpu.pipeline_mode<synchronous>, transform_indices = @transform_3, window_bounds = array<i64: 128, 128>}, {pipeline_mode = #tpu.pipeline_mode<synchronous>, transform_indices = @transform_4, window_bounds = array<i64: 1, 128>}, {transform_indices = @transform_5, window_bounds = array<i64: 8, 128>}, {transform_indices = @transform_6, window_bounds = array<i64: 8, 128>}]} {
    %c0 = arith.constant 0 : index
    %c0_0 = arith.constant 0 : index
    %0 = vector.load %arg1[%c0, %c0_0] : memref<8x128xbf16, #tpu.memory_space<vmem>>, vector<8x128xbf16>
    %c0_1 = arith.constant 0 : index
    %c0_2 = arith.constant 0 : index
    %1 = vector.load %arg2[%c0_1, %c0_2] : memref<128x128xbf16, #tpu.memory_space<vmem>>, vector<128x128xbf16>
    %cst = arith.constant dense<0.000000e+00> : vector<8x128xf32>
    %2 = tpu.matmul %0, %1, %cst {dimension_numbers = #tpu.dot_dimension_numbers<[1], [0], [0], [1], [0, 0, 1, 1], [], []>} : vector<8x128xbf16>, vector<128x128xbf16>, vector<8x128xf32> -> vector<8x128xf32>
    %c0_3 = arith.constant 0 : index
    %c0_4 = arith.constant 0 : index
    %3 = vector.load %arg3[%c0_3, %c0_4] : memref<1x128xf32, #tpu.memory_space<vmem>>, vector<1x128xf32>
    %4 = vector.broadcast %3 : vector<1x128xf32> to vector<8x128xf32>
    %5 = arith.addf %2, %4 : vector<8x128xf32>
    %cst_5 = arith.constant 0.000000e+00 : f32
    %6 = vector.broadcast %cst_5 : f32 to vector<8x128xf32>
    %7 = arith.maximumf %5, %6 : vector<8x128xf32>
    %c0_6 = arith.constant 0 : index
    %c0_7 = arith.constant 0 : index
    %8 = vector.load %arg6[%c0_6, %c0_7] : memref<8x128xf32, #tpu.memory_space<vmem>>, vector<8x128xf32>
    tpu.vector_store %arg6[%c0_6, %c0_7], %7 {strides = array<i32>} : memref<8x128xf32, #tpu.memory_space<vmem>>, vector<8x128xf32>,
    %9 = arith.truncf %7 : vector<8x128xf32> to vector<8x128xbf16>
    %c0_8 = arith.constant 0 : index
    %c0_9 = arith.constant 0 : index
    %10 = vector.load %arg4[%c0_8, %c0_9] : memref<128x128xbf16, #tpu.memory_space<vmem>>, vector<128x128xbf16>
    %cst_10 = arith.constant dense<0.000000e+00> : vector<8x128xf32>
    %11 = tpu.matmul %9, %10, %cst_10 {dimension_numbers = #tpu.dot_dimension_numbers<[1], [0], [0], [1], [0, 0, 1, 1], [], []>} : vector<8x128xbf16>, vector<128x128xbf16>, vector<8x128xf32> -> vector<8x128xf32>
    %c0_11 = arith.constant 0 : index
    %c0_12 = arith.constant 0 : index
    %12 = vector.load %arg5[%c0_11, %c0_12] : memref<1x128xf32, #tpu.memory_space<vmem>>, vector<1x128xf32>
    %13 = vector.broadcast %12 : vector<1x128xf32> to vector<8x128xf32>
    %14 = arith.addf %11, %13 : vector<8x128xf32>
    %cst_13 = arith.constant 0.000000e+00 : f32
    %15 = vector.broadcast %cst_13 : f32 to vector<8x128xf32>
    %16 = arith.maximumf %14, %15 : vector<8x128xf32>
    %17 = math.absf %14 : vector<8x128xf32>
    %cst_14 = arith.constant 0.000000e+00 : f32
    %18 = vector.broadcast %cst_14 : f32 to vector<8x128xf32>
    %19 = arith.subf %18, %17 : vector<8x128xf32>
    %20 = math.exp %19 : vector<8x128xf32>
    %21 = math.log1p %20 : vector<8x128xf32>
    %22 = arith.addf %16, %21 : vector<8x128xf32>
    %cst_15 = arith.constant 9.99999997E-7 : f32
    %23 = vector.broadcast %cst_15 : f32 to vector<8x128xf32>
    %24 = arith.maximumf %22, %23 : vector<8x128xf32>
    %25 = math.log %24 : vector<8x128xf32>
    %26 = tpu.iota {dimensions = array<i32: 1>} : vector<8x128xi32>
    %c4_i32 = arith.constant 4 : i32
    %27 = vector.broadcast %c4_i32 : i32 to vector<8x128xi32>
    %28 = arith.cmpi eq, %26, %27 : vector<8x128xi32>
    %29 = arith.select %28, %25, %14 : vector<8x128xi1>, vector<8x128xf32>
    %c0_16 = arith.constant 0 : index
    %c0_17 = arith.constant 0 : index
    %30 = vector.load %arg7[%c0_16, %c0_17] : memref<8x128xf32, #tpu.memory_space<vmem>>, vector<8x128xf32>
    tpu.vector_store %arg7[%c0_16, %c0_17], %29 {strides = array<i32>} : memref<8x128xf32, #tpu.memory_space<vmem>>, vector<8x128xf32>,
    return
  }
  func.func @transform_0(%arg0: i32) -> (i32, i32) {
    %c0_i32 = arith.constant 0 : i32
    %c0_i32_0 = arith.constant 0 : i32
    return %arg0, %c0_i32 : i32, i32
  }
  func.func @transform_1(%arg0: i32) -> (i32, i32) {
    %c0_i32 = arith.constant 0 : i32
    %c0_i32_0 = arith.constant 0 : i32
    %c0_i32_1 = arith.constant 0 : i32
    return %c0_i32, %c0_i32_0 : i32, i32
  }
  func.func @transform_2(%arg0: i32) -> (i32, i32) {
    %c0_i32 = arith.constant 0 : i32
    %c0_i32_0 = arith.constant 0 : i32
    %c0_i32_1 = arith.constant 0 : i32
    return %c0_i32, %c0_i32_0 : i32, i32
  }
  func.func @transform_3(%arg0: i32) -> (i32, i32) {
    %c0_i32 = arith.constant 0 : i32
    %c0_i32_0 = arith.constant 0 : i32
    %c0_i32_1 = arith.constant 0 : i32
    return %c0_i32, %c0_i32_0 : i32, i32
  }
  func.func @transform_4(%arg0: i32) -> (i32, i32) {
    %c0_i32 = arith.constant 0 : i32
    %c0_i32_0 = arith.constant 0 : i32
    %c0_i32_1 = arith.constant 0 : i32
    return %c0_i32, %c0_i32_0 : i32, i32
  }
  func.func @transform_5(%arg0: i32) -> (i32, i32) {
    %c0_i32 = arith.constant 0 : i32
    %c0_i32_0 = arith.constant 0 : i32
    return %arg0, %c0_i32 : i32, i32
  }
  func.func @transform_6(%arg0: i32) -> (i32, i32) {
    %c0_i32 = arith.constant 0 : i32
    %c0_i32_0 = arith.constant 0 : i32
    return %arg0, %c0_i32 : i32, i32
  }
}

</mosaic_0001>

<llo_original>
// kernel: tpu_custom_call.1
$region0: #{tpu_custom_call.1}
  #allocation0 [shape = 'u32[]', space=smem, size = 0x4, offset = 0x4, fixed_abs, tag = 'smem constant byte address 0x4 - core index']
  #allocation1 [shape = 'u32[72,128]{1,0:T(1,128)}', space=vmem, size = 0x9000, scoped, tag = 'internal scratch']
  %s0 = inlined_call_operand.hbm [shape: bf16[8,128], index: 0, kind: input, shape index: {}]
  %s1 = inlined_call_operand.hbm [shape: bf16[128,128], index: 1, kind: input, shape index: {}]
  %s2 = inlined_call_operand.vmem [shape: f32[1,128], index: 2, kind: input, shape index: {}]
  %s3 = inlined_call_operand.hbm [shape: bf16[128,128], index: 3, kind: input, shape index: {}]
  %s4 = inlined_call_operand.vmem [shape: f32[1,128], index: 4, kind: input, shape index: {}]
  %s5 = inlined_call_operand.hbm [shape: f32[8,128], index: 5, kind: output, shape index: {0}]
  %s6 = inlined_call_operand.hbm [shape: f32[8,128], index: 6, kind: output, shape index: {1}]
  %7 = xla_tuple %s5, %s6
  %s8 = sld [smem:[#allocation0]]
  $region50: #{tpu_custom_call.1} parent=0
    _
  %s10 = ssub.s32 1, %s8
  %s11 = scalar_select 0, %s10, %s8
  $region1: #{tpu_custom_call.1} parent=0
    #allocation2 [shape = 'u8[2048]{0}', space=vmem, size = 0x800, scoped, tag = 'input window, operand 0, single buffered']
    #allocation3 [shape = 's32[1]{0}', space=sflag, size = 0x4, scoped, tag = 'scoped memory for tpu_custom_call.1']
    #allocation4 [shape = 's32[1]{0}', space=sflag, size = 0x4, scoped, tag = 'scoped memory for tpu_custom_call.1']
    #allocation5 [shape = 'u8[32768]{0}', space=vmem, size = 0x8000, scoped, tag = 'input window, operand 1, single buffered']
    #allocation6 [shape = 's32[1]{0}', space=sflag, size = 0x4, scoped, tag = 'scoped memory for tpu_custom_call.1']
    #allocation7 [shape = 'u8[32768]{0}', space=vmem, size = 0x8000, scoped, tag = 'input window, operand 3, single buffered']
    #allocation8 [shape = 'u8[4096]{0}', space=vmem, size = 0x1000, scoped, tag = 'output window, operand 0, single buffered']
    #allocation9 [shape = 'u8[4096]{0}', space=vmem, size = 0x1000, scoped, tag = 'output window, operand 1, single buffered']
    #allocation10 [shape = 's32[1]{0}', space=sflag, size = 0x4, scoped, tag = 'scoped memory for tpu_custom_call.1']
    %12 = vsyncpa [#allocation3], 0
    %13 = vsyncpa [#allocation6], 0
    %14 = vsyncpa [#allocation4], 0
    %15 = vsyncpa [#allocation10], 0
    // Predicated region
    $region2: #{tpu_custom_call.1} parent=1 // pred_check
      _
    $region3: #{tpu_custom_call.1} parent=1 // pred_check_branch
      %17 = sbr.rel (0) target = $region5
    $region4: #{tpu_custom_call.1} parent=1 // pred_region
      %19 = vsyncadd [#allocation3], 0
      %s21 = sshll.u32 %s0, 4
      %s22 = int_to_ptr.hbm [resolvable:$true] %s21
      %s23 = sshll.u32 [#allocation2], 4
      %s24 = int_to_ptr.vmem [resolvable:$true] %s23
      %26 = dma.hbm_to_vmem [thread:$0]  %s22, 64, %s24, [#allocation3]
    $region5: #{tpu_custom_call.1} parent=1 // pred_fallthru
      _
    // Predicated region
    $region6: #{tpu_custom_call.1} parent=1 // pred_check
      _
    $region7: #{tpu_custom_call.1} parent=1 // pred_check_branch
      %28 = sbr.rel (0) target = $region9
    $region8: #{tpu_custom_call.1} parent=1 // pred_region
      %30 = vsyncadd [#allocation6], 0
      %s31 = sshll.u32 %s1, 4
      %s32 = int_to_ptr.hbm [resolvable:$true] %s31
      %s33 = sshll.u32 [#allocation5], 4
      %s34 = int_to_ptr.vmem [resolvable:$true] %s33
      %39 = dma.hbm_to_vmem [thread:$0]  %s32, 1024, %s34, [#allocation6], 64, 64, 4
    $region9: #{tpu_custom_call.1} parent=1 // pred_fallthru
      _
    // Predicated region
    $region10: #{tpu_custom_call.1} parent=1 // pred_check
      _
    $region11: #{tpu_custom_call.1} parent=1 // pred_check_branch
      %41 = sbr.rel (0) target = $region13
    $region12: #{tpu_custom_call.1} parent=1 // pred_region
      _
    $region13: #{tpu_custom_call.1} parent=1 // pred_fallthru
      _
    // Predicated region
    $region14: #{tpu_custom_call.1} parent=1 // pred_check
      _
    $region15: #{tpu_custom_call.1} parent=1 // pred_check_branch
      %43 = sbr.rel (0) target = $region17
    $region16: #{tpu_custom_call.1} parent=1 // pred_region
      %45 = vsyncadd [#allocation6], 0
      %s46 = sshll.u32 %s3, 4
      %s47 = int_to_ptr.hbm [resolvable:$true] %s46
      %s48 = sshll.u32 [#allocation7], 4
      %s49 = int_to_ptr.vmem [resolvable:$true] %s48
      %54 = dma.hbm_to_vmem [thread:$0]  %s47, 1024, %s49, [#allocation6], 64, 64, 4
    $region17: #{tpu_custom_call.1} parent=1 // pred_fallthru
      _
    // Predicated region
    $region18: #{tpu_custom_call.1} parent=1 // pred_check
      _
    $region19: #{tpu_custom_call.1} parent=1 // pred_check_branch
      %56 = sbr.rel (0) target = $region21
    $region20: #{tpu_custom_call.1} parent=1 // pred_region
      _
    $region21: #{tpu_custom_call.1} parent=1 // pred_fallthru
      _
    // Predicated region
    $region22: #{tpu_custom_call.1} parent=1 // pred_check
      _
    $region23: #{tpu_custom_call.1} parent=1 // pred_check_branch
      %58 = sbr.rel (0) target = $region25
    $region24: #{tpu_custom_call.1} parent=1 // pred_region
      %60 = dma.done [#allocation3], 64
    $region25: #{tpu_custom_call.1} parent=1 // pred_fallthru
      _
    // Predicated region
    $region26: #{tpu_custom_call.1} parent=1 // pred_check
      _
    $region27: #{tpu_custom_call.1} parent=1 // pred_check_branch
      %62 = sbr.rel (0) target = $region29
    $region28: #{tpu_custom_call.1} parent=1 // pred_region
      %64 = dma.done [#allocation6], 1024
    $region29: #{tpu_custom_call.1} parent=1 // pred_fallthru
      _
    // Predicated region
    $region30: #{tpu_custom_call.1} parent=1 // pred_check
      _
    $region31: #{tpu_custom_call.1} parent=1 // pred_check_branch
      %66 = sbr.rel (0) target = $region33
    $region32: #{tpu_custom_call.1} parent=1 // pred_region
      %68 = dma.done [#allocation6], 1024
    $region33: #{tpu_custom_call.1} parent=1 // pred_fallthru
      _
    %v69 = vld [vmem:[#allocation2] sm:$0xf]
    %v70 = vld [vmem:[#allocation5] sm:$0xf]
    %v71 = vld [vmem:[#allocation5 + $0x4] sm:$0xf]
    %v72 = vld [vmem:[#allocation5 + $0x8] sm:$0xf]
    %v73 = vld [vmem:[#allocation5 + $0xc] sm:$0xf]
    %v74 = vld [vmem:[#allocation5 + $0x10] sm:$0xf]
    %v75 = vld [vmem:[#allocation5 + $0x14] sm:$0xf]
    %v76 = vld [vmem:[#allocation5 + $0x18] sm:$0xf]
    %v77 = vld [vmem:[#allocation5 + $0x1c] sm:$0xf]
    %v78 = vld [vmem:[#allocation5 + $0x20] sm:$0xf]
    %v79 = vld [vmem:[#allocation5 + $0x24] sm:$0xf]
    %v80 = vld [vmem:[#allocation5 + $0x28] sm:$0xf]
    %v81 = vld [vmem:[#allocation5 + $0x2c] sm:$0xf]
    %v82 = vld [vmem:[#allocation5 + $0x30] sm:$0xf]
    %v83 = vld [vmem:[#allocation5 + $0x34] sm:$0xf]
    %v84 = vld [vmem:[#allocation5 + $0x38] sm:$0xf]
    %v85 = vld [vmem:[#allocation5 + $0x3c] sm:$0xf]
    %v86 = vld [vmem:[%s2] sm:$0x1]
    %v88 = vperm.slane %v86, 0
    %v106 = vunpack.c.l.b16 %v70
    %v107 = vunpack.c.l.b16 %v71
    %v108 = vunpack.c.l.b16 %v72
    %v109 = vunpack.c.l.b16 %v73
    %v110 = vunpack.c.l.b16 %v74
    %v111 = vunpack.c.l.b16 %v75
    %v112 = vunpack.c.l.b16 %v76
    %v113 = vunpack.c.l.b16 %v77
    %v114 = vunpack.c.l.b16 %v78
    %v115 = vunpack.c.l.b16 %v79
    %v116 = vunpack.c.l.b16 %v80
    %v117 = vunpack.c.l.b16 %v81
    %v118 = vunpack.c.l.b16 %v82
    %v119 = vunpack.c.l.b16 %v83
    %v120 = vunpack.c.l.b16 %v84
    %v121 = vunpack.c.l.b16 %v85
    %v122 = vpack.c.b16 %v107, %v106
    %v123 = vpack.c.b16 %v109, %v108
    %v124 = vpack.c.b16 %v111, %v110
    %v125 = vpack.c.b16 %v113, %v112
    %v126 = vpack.c.b16 %v115, %v114
    %v127 = vpack.c.b16 %v117, %v116
    %v128 = vpack.c.b16 %v119, %v118
    %v129 = vpack.c.b16 %v121, %v120
    %138 = vmatpush.bf16.msra.mxu0 %v129
    %139 = vmatpush.bf16.msra.mxu0 %v128
    %140 = vmatpush.bf16.msra.mxu0 %v127
    %141 = vmatpush.bf16.msra.mxu0 %v126
    %142 = vmatpush.bf16.msra.mxu0 %v125
    %143 = vmatpush.bf16.msra.mxu0 %v124
    %144 = vmatpush.bf16.msra.mxu0 %v123
    %145 = vmatpush.bf16.msra.mxu0 %v122
    %146 = vmatmul.bf16.gmra.mxu0 %v69
    %v147 = vpop.f32.mrf.mxu0
    %v148 = vadd.f32 %v88, %v147
    %v149 = vpop.f32.mrf.mxu0
    %150 = vdwg.mxu0
    %v151 = vmax.f32 %v148, 0.0
    %152 = vst [vmem:[#allocation8] sm:$0xff] %v151
    %v153 = vpack.c.bf16 %v151, %v151
    %v154 = vld [vmem:[#allocation7] sm:$0xf]
    %v155 = vld [vmem:[#allocation7 + $0x4] sm:$0xf]
    %v156 = vld [vmem:[#allocation7 + $0x8] sm:$0xf]
    %v157 = vld [vmem:[#allocation7 + $0xc] sm:$0xf]
    %v158 = vld [vmem:[#allocation7 + $0x10] sm:$0xf]
    %v159 = vld [vmem:[#allocation7 + $0x14] sm:$0xf]
    %v160 = vld [vmem:[#allocation7 + $0x18] sm:$0xf]
    %v161 = vld [vmem:[#allocation7 + $0x1c] sm:$0xf]
    %v162 = vld [vmem:[#allocation7 + $0x20] sm:$0xf]
    %v163 = vld [vmem:[#allocation7 + $0x24] sm:$0xf]
    %v164 = vld [vmem:[#allocation7 + $0x28] sm:$0xf]
    %v165 = vld [vmem:[#allocation7 + $0x2c] sm:$0xf]
    %v166 = vld [vmem:[#allocation7 + $0x30] sm:$0xf]
    %v167 = vld [vmem:[#allocation7 + $0x34] sm:$0xf]
    %v168 = vld [vmem:[#allocation7 + $0x38] sm:$0xf]
    %v169 = vld [vmem:[#allocation7 + $0x3c] sm:$0xf]
    %v170 = vld [vmem:[%s4] sm:$0x1]
    %v172 = vperm.slane %v170, 0
    %v190 = vunpack.c.l.b16 %v154
    %v191 = vunpack.c.l.b16 %v155
    %v192 = vunpack.c.l.b16 %v156
    %v193 = vunpack.c.l.b16 %v157
    %v194 = vunpack.c.l.b16 %v158
    %v195 = vunpack.c.l.b16 %v159
    %v196 = vunpack.c.l.b16 %v160
    %v197 = vunpack.c.l.b16 %v161
    %v198 = vunpack.c.l.b16 %v162
    %v199 = vunpack.c.l.b16 %v163
    %v200 = vunpack.c.l.b16 %v164
    %v201 = vunpack.c.l.b16 %v165
    %v202 = vunpack.c.l.b16 %v166
    %v203 = vunpack.c.l.b16 %v167
    %v204 = vunpack.c.l.b16 %v168
    %v205 = vunpack.c.l.b16 %v169
    %v206 = vpack.c.b16 %v191, %v190
    %v207 = vpack.c.b16 %v193, %v192
    %v208 = vpack.c.b16 %v195, %v194
    %v209 = vpack.c.b16 %v197, %v196
    %v210 = vpack.c.b16 %v199, %v198
    %v211 = vpack.c.b16 %v201, %v200
    %v212 = vpack.c.b16 %v203, %v202
    %v213 = vpack.c.b16 %v205, %v204
    %222 = vmatpush.bf16.msra.mxu0 %v213
    %223 = vmatpush.bf16.msra.mxu0 %v212
    %224 = vmatpush.bf16.msra.mxu0 %v211
    %225 = vmatpush.bf16.msra.mxu0 %v210
    %226 = vmatpush.bf16.msra.mxu0 %v209
    %227 = vmatpush.bf16.msra.mxu0 %v208
    %228 = vmatpush.bf16.msra.mxu0 %v207
    %229 = vmatpush.bf16.msra.mxu0 %v206
    %230 = vmatmul.bf16.gmra.mxu0 %v153
    %v231 = vpop.f32.mrf.mxu0
    %v232 = vadd.f32 %v172, %v231
    %v233 = vpop.f32.mrf.mxu0
    %234 = vdwg.mxu0
    %v235 = vmax.f32 %v232, 0.0
    %v236 = vand.u32 2147483647, %v232
    %v237 = vsub.f32 0.0, %v236
    %v238 = vmul.f32 %v237, 1.442695
    %v239 = vpow.pop %v238
    %v240 = vadd.f32 %v239, 1.0
    %v241 = vlog2.pop %v240
    %v242 = vmul.f32 %v241, 0.6931472
    %v243 = vmul.f32 -0.5, %v239
    %v244 = vadd.f32 %v243, 1.0
    %v245 = vmul.f32 %v244, %v239
    %v246 = vand.u32 2147483647, %v239
    %vm247 = vcmp.lt.f32.partialorder %v246, 0.0004427343
    %v248 = vsel %vm247, %v245, %v242
    %v249 = vadd.f32 %v235, %v248
    %v250 = vmax.f32 %v249, 1e-06
    %v251 = vlog2.pop %v250
    %v252 = vmul.f32 %v251, 0.6931472
    %v253 = vlaneseq
    %v254 = vand.u32 %v253, 127
    %vm255 = vcmp.eq.s32.totalorder %v254, 4
    %v256 = vsel %vm255, %v252, %v232
    %257 = vst [vmem:[#allocation9] sm:$0xff] %v256
    // Predicated region
    $region34: #{tpu_custom_call.1} parent=1 // pred_check
      _
    $region35: #{tpu_custom_call.1} parent=1 // pred_check_branch
      %259 = sbr.rel (0) target = $region37
    $region36: #{tpu_custom_call.1} parent=1 // pred_region
      %261 = vsyncadd [#allocation4], 0
      %s263 = sshll.u32 [#allocation8], 4
      %s264 = int_to_ptr.vmem [resolvable:$true] %s263
      %s265 = sshll.u32 %s5, 4
      %s266 = int_to_ptr.hbm [resolvable:$true] %s265
      %268 = dma.vmem_to_hbm [thread:$0]  %s264, 128, %s266, [#allocation4]
    $region37: #{tpu_custom_call.1} parent=1 // pred_fallthru
      _
    // Predicated region
    $region38: #{tpu_custom_call.1} parent=1 // pred_check
      _
    $region39: #{tpu_custom_call.1} parent=1 // pred_check_branch
      %270 = sbr.rel (0) target = $region41
    $region40: #{tpu_custom_call.1} parent=1 // pred_region
      %272 = vsyncadd [#allocation10], 0
      %s274 = sshll.u32 [#allocation9], 4
      %s275 = int_to_ptr.vmem [resolvable:$true] %s274
      %s276 = sshll.u32 %s6, 4
      %s277 = int_to_ptr.hbm [resolvable:$true] %s276
      %279 = dma.vmem_to_hbm [thread:$0]  %s275, 128, %s277, [#allocation10]
    $region41: #{tpu_custom_call.1} parent=1 // pred_fallthru
      _
    // Predicated region
    $region42: #{tpu_custom_call.1} parent=1 // pred_check
      _
    $region43: #{tpu_custom_call.1} parent=1 // pred_check_branch
      %281 = sbr.rel (0) target = $region45
    $region44: #{tpu_custom_call.1} parent=1 // pred_region
      %283 = dma.done [#allocation4], 128
    $region45: #{tpu_custom_call.1} parent=1 // pred_fallthru
      _
    // Predicated region
    $region46: #{tpu_custom_call.1} parent=1 // pred_check
      _
    $region47: #{tpu_custom_call.1} parent=1 // pred_check_branch
      %285 = sbr.rel (0) target = $region49
    $region48: #{tpu_custom_call.1} parent=1 // pred_region
      %287 = dma.done [#allocation10], 128
    $region49: #{tpu_custom_call.1} parent=1 // pred_fallthru
      _
    %288 = vsyncpa [#allocation3], 1
    %289 = vsyncpa [#allocation6], 1
    %290 = vsyncpa [#allocation4], 1
    %291 = vsyncpa [#allocation10], 1

</llo_original>
